<compile_context>
chip_gen: v7x
topology: tpu7x:2x2x1
jax: 0.10.0
libtpu: 0.0.40
codegen_flags: <defaults>
</compile_context>

<pallas_src>
import jax
import jax.numpy as jnp
from jax import lax
from jax.experimental import pallas as pl
from jax.experimental.pallas import tpu as pltpu


# ----------------------------- tiling helpers ------------------------------

_VMEM_BUFFER_BUDGET = 24 * 1024 * 1024     # per-step buffer budget (out x2 + pos x2 + row_buf x2)
_VMEM_LIMIT_BYTES = 32 * 1024 * 1024       # scoped VMEM limit (safe on v5e/v6e/v7x)
_FAST_PATH_TABLE_BYTES = 4 * 1024 * 1024   # token table must fit comfortably in VMEM
_FAST_PATH_MAX_VOCAB = 2048                # keep the one-hot intermediate small
_MAX_SMEM_TOKEN_IDS = 1 << 18              # B*L int32 ids scalar-prefetched into SMEM


def _pick_row_tile(L, d_model, dtype):
    """Largest TL such that TL | L, TL % 8 == 0 (or TL == L), and buffers fit the budget."""
    itemsize = jnp.dtype(dtype).itemsize
    cap = max(8, _VMEM_BUFFER_BUDGET // (6 * d_model * itemsize))
    best = None
    for d in range(1, L + 1):
        if L % d == 0 and d % 8 == 0 and d <= cap:
            best = d
    if best is not None:
        return best
    return L  # full sequence dim is always a legal block size on the sublane axis


# ------------------------- large-vocab DMA gather path ----------------------

def _make_gather_kernel(L, TL, vocab_size, with_pos):
    group = 8 if TL % 8 == 0 else 1

    def body(toks_ref, tbl_hbm, pos_ref, out_ref, row_buf, sem):
        lt = pl.program_id(0)
        b = pl.program_id(1)
        nb = pl.num_programs(1)

        def issue(b_tgt, slot):
            base = b_tgt * L + lt * TL

            @pl.loop(0, TL // group)
            def _issue(g):
                for u in range(group):  # 8x-unrolled DMA issue (packs scalar addr math)
                    r = g * group + u
                    tok = jnp.clip(toks_ref[base + r], 0, vocab_size - 1)
                    pltpu.make_async_copy(
                        tbl_hbm.at[tok], row_buf.at[slot, r], sem.at[slot]).start()

        def wait_all(slot):
            @pl.loop(0, TL)
            def _wait(_):
                # One-row descriptor; only shape/dtype + semaphore matter for wait().
                pltpu.make_async_copy(
                    tbl_hbm.at[0], row_buf.at[slot, 0], sem.at[slot]).wait()

        # Prime the pipeline at the start of each inner row (megacore-safe: each core
        # that owns an lt row starts at b == 0).
        @pl.when(b == 0)
        def _prime():
            issue(0, 0)

        slot = b % 2

        # Cross-tile prefetch: start the NEXT step's row gather before waiting on the
        # current slot, so the random-HBM-read latency overlaps add/store + writeback.
        @pl.when(b + 1 < nb)
        def _prefetch():
            issue(b + 1, 1 - slot)

        wait_all(slot)

        rows = row_buf[slot]
        if with_pos:
            rows = rows + pos_ref[...]
        out_ref[0] = rows.astype(out_ref.dtype)

    if with_pos:
        def kernel(toks_ref, tbl_hbm, pos_ref, out_ref, row_buf, sem):
            body(toks_ref, tbl_hbm, pos_ref, out_ref, row_buf, sem)
    else:
        def kernel(toks_ref, tbl_hbm, out_ref, row_buf, sem):
            body(toks_ref, tbl_hbm, None, out_ref, row_buf, sem)
    return kernel


def _text_embedding_gather(tokens, tok_table, pos_table, TL):
    B, L = tokens.shape
    V, D = tok_table.shape
    with_pos = pos_table is not None
    n_l = L // TL

    assert B * L <= _MAX_SMEM_TOKEN_IDS, (
        "token ids are scalar-prefetched into SMEM; B*L too large for this path")

    toks_flat = tokens.reshape(B * L).astype(jnp.int32)
    kernel = _make_gather_kernel(L, TL, V, with_pos)

    in_specs = [pl.BlockSpec(memory_space=pl.ANY)]  # (V, D) token table stays in HBM
    args = [toks_flat, tok_table]
    if with_pos:
        # Block index depends only on lt (outer axis) => same pos block across the whole
        # inner batch axis, so Pallas elides the repeated copy.
        in_specs.append(pl.BlockSpec((TL, D), lambda lt, b, toks: (lt, 0)))
        args.append(pos_table)

    return pl.pallas_call(
        kernel,
        out_shape=jax.ShapeDtypeStruct((B, L, D), tok_table.dtype),
        grid_spec=pltpu.PrefetchScalarGridSpec(
            num_scalar_prefetch=1,
            grid=(n_l, B),                                     # lt outer, b inner
            in_specs=in_specs,
            out_specs=pl.BlockSpec((1, TL, D), lambda lt, b, toks: (b, lt, 0)),
            scratch_shapes=[
                pltpu.VMEM((2, TL, D), tok_table.dtype),       # double-buffered gathered rows
                pltpu.SemaphoreType.DMA((2,)),                 # one DMA sem per buffer slot
            ],
        ),
        compiler_params=pltpu.CompilerParams(
            # Inner (batch) axis carries the cross-step prefetch chain -> sequential.
            # Outer tile axis is independent -> splittable across v7x's two cores.
            dimension_semantics=("parallel", "arbitrary"),
            vmem_limit_bytes=_VMEM_LIMIT_BYTES,
        ),
    )(*args)


# --------------------------- small-vocab fast path ---------------------------

def _make_onehot_kernel(vocab_size, TL, with_pos):
    def body(toks_ref, tbl_ref, pos_ref, out_ref):
        lt = pl.program_id(0)
        b = pl.program_id(1)
        ids = toks_ref[pl.ds(b, 1), pl.ds(lt, 1), :].reshape(1, TL)
        ids = jnp.clip(ids, 0, vocab_size - 1)
        onehot = (lax.broadcasted_iota(jnp.int32, (vocab_size, TL), 0) == ids)
        onehot = onehot.astype(tbl_ref.dtype)
        # onehot.T @ table  ->  (TL, D); exact gather since weights are 0/1.
        rows = lax.dot_general(
            onehot, tbl_ref[...],
            dimension_numbers=(((0,), (0,)), ((), ())),
            preferred_element_type=jnp.float32)
        if with_pos:
            rows = rows + pos_ref[...]
        out_ref[0] = rows.astype(out_ref.dtype)

    if with_pos:
        def kernel(toks_ref, tbl_ref, pos_ref, out_ref):
            body(toks_ref, tbl_ref, pos_ref, out_ref)
    else:
        def kernel(toks_ref, tbl_ref, out_ref):
            body(toks_ref, tbl_ref, None, out_ref)
    return kernel


def _text_embedding_small_vocab(tokens, tok_table, pos_table, TL):
    B, L = tokens.shape
    V, D = tok_table.shape
    with_pos = pos_table is not None
    n_l = L // TL

    toks3 = tokens.reshape(B, n_l, TL).astype(jnp.int32)
    kernel = _make_onehot_kernel(V, TL, with_pos)

    in_specs = [
        pl.BlockSpec((B, n_l, TL), lambda lt, b: (0, 0, 0)),   # all ids, VMEM-resident (elided)
        pl.BlockSpec((V, D), lambda lt, b: (0, 0)),            # whole table, VMEM-resident (elided)
    ]
    args = [toks3, tok_table]
    if with_pos:
        in_specs.append(pl.BlockSpec((TL, D), lambda lt, b: (lt, 0)))
        args.append(pos_table)

    return pl.pallas_call(
        kernel,
        out_shape=jax.ShapeDtypeStruct((B, L, D), tok_table.dtype),
        grid_spec=pltpu.PrefetchScalarGridSpec(
            num_scalar_prefetch=0,
            grid=(n_l, B),
            in_specs=in_specs,
            out_specs=pl.BlockSpec((1, TL, D), lambda lt, b: (b, lt, 0)),
        ),
        compiler_params=pltpu.CompilerParams(
            dimension_semantics=("parallel", "parallel"),
            vmem_limit_bytes=_VMEM_LIMIT_BYTES,
        ),
    )(*args)


# --------------------------------- dispatcher --------------------------------

def text_embedding(tokens, tok_table, pos_table=None, row_tile=None, force_dma_gather=False):
    """tokens: (B, L) int -> (B, L, D) = tok_table[tokens] (+ pos_table if given)."""
    B, L = tokens.shape
    V, D = tok_table.shape
    if pos_table is not None:
        assert pos_table.shape == (L, D), "pos_table must be (seq_len, d_model)"

    TL = row_tile if row_tile is not None else _pick_row_tile(L, D, tok_table.dtype)
    assert L % TL == 0

    table_bytes = V * D * jnp.dtype(tok_table.dtype).itemsize
    use_fast = (not force_dma_gather
                and table_bytes <= _FAST_PATH_TABLE_BYTES
                and V <= _FAST_PATH_MAX_VOCAB
                and B * L * 4 <= (2 << 20))
    if use_fast:
        return _text_embedding_small_vocab(tokens, tok_table, pos_table, TL)
    return _text_embedding_gather(tokens, tok_table, pos_table, TL)


def init_params(key, vocab_size, d_model, seq_len, positional_encoding=True,
                padding_idx=None):
    """Synthetic init matching nn.Embedding (N(0,1); padding row zeroed)."""
    k_tok, k_pos = jax.random.split(key)
    tok_table = jax.random.normal(k_tok, (vocab_size, d_model), jnp.float32)
    if padding_idx is not None:
        tok_table = tok_table.at[padding_idx].set(0.0)
    pos_table = (jax.random.normal(k_pos, (seq_len, d_model), jnp.float32)
                 if positional_encoding else None)
    return tok_table, pos_table


if __name__ == "__main__":
    B, L = 2, 8
    vocab_size, d_model = 64, 128
    padding_idx = 0
    # TODO(synk): padding_idx only affects gradients in nn.Embedding; the forward pass is identical.

    key = jax.random.PRNGKey(0)
    k_params, k_tok = jax.random.split(key)
    tok_table, pos_table = init_params(k_params, vocab_size, d_model, L,
                                       positional_encoding=True,
                                       padding_idx=padding_idx)
    tokens = jax.random.randint(k_tok, (B, L), 0, vocab_size, dtype=jnp.int32)

    ref_pos = tok_table[tokens] + pos_table[None, :, :]
    ref_nopos = tok_table[tokens]

    # Small-vocab fast path (VMEM-resident table, one-hot MXU gather).
    out_fast = jax.block_until_ready(text_embedding(tokens, tok_table, pos_table))
    assert out_fast.shape == (B, L, d_model)
    assert out_fast.dtype == jnp.float32
    assert jnp.allclose(out_fast, ref_pos, atol=1e-5, rtol=1e-5)

    out_fast_np = jax.block_until_ready(text_embedding(tokens, tok_table, None))
    assert jnp.allclose(out_fast_np, ref_nopos, atol=1e-5, rtol=1e-5)

    # Large-vocab path (HBM table, double-buffered per-row DMA gather), forced for coverage.
    out_dma = jax.block_until_ready(
        text_embedding(tokens, tok_table, pos_table, force_dma_gather=True))
    assert jnp.allclose(out_dma, ref_pos, atol=1e-6, rtol=1e-6)

    out_dma_np = jax.block_until_ready(
        text_embedding(tokens, tok_table, None, force_dma_gather=True))
    assert jnp.allclose(out_dma_np, ref_nopos, atol=1e-6, rtol=1e-6)

    print("KERNEL_OK")
</pallas_src>

<mosaic_0001>
module attributes {stable_mosaic.version = 11 : i64} {
  func.func @kernel(%arg0: i32, %arg1: i32, %arg2: memref<2x1x8xi32, #tpu.memory_space<vmem>>, %arg3: memref<64x128xf32, #tpu.memory_space<vmem>>, %arg4: memref<8x128xf32, #tpu.memory_space<vmem>>, %arg5: memref<1x8x128xf32, #tpu.memory_space<vmem>>) attributes {dimension_semantics = [#tpu.dimension_semantics<parallel>, #tpu.dimension_semantics<parallel>], iteration_bounds = array<i64: 1, 2>, scalar_prefetch = 0 : i64, scratch_operands = 0 : i64, tpu.core_type = #tpu.core_type<tc>, window_params = [{pipeline_mode = #tpu.pipeline_mode<synchronous>, transform_indices = @transform_0, window_bounds = array<i64: 2, 1, 8>}, {pipeline_mode = #tpu.pipeline_mode<synchronous>, transform_indices = @transform_1, window_bounds = array<i64: 64, 128>}, {transform_indices = @transform_2, window_bounds = array<i64: 8, 128>}, {transform_indices = @transform_3, window_bounds = array<i64: 1, 8, 128>}]} {
    %0 = arith.index_cast %arg1 : i32 to index
    %1 = arith.index_cast %arg0 : i32 to index
    %c0 = arith.constant 0 : index
    %2 = vector.load %arg2[%0, %1, %c0] : memref<2x1x8xi32, #tpu.memory_space<vmem>>, vector<1x1x8xi32>
    %3 = vector.shape_cast %2 : vector<1x1x8xi32> to vector<1x8xi32>
    %c0_i32 = arith.constant 0 : i32
    %c63_i32 = arith.constant 63 : i32
    %4 = vector.broadcast %c0_i32 : i32 to vector<1x8xi32>
    %5 = arith.maxsi %4, %3 : vector<1x8xi32>
    %6 = vector.broadcast %c63_i32 : i32 to vector<1x8xi32>
    %7 = arith.minsi %6, %5 : vector<1x8xi32>
    %8 = tpu.iota {dimensions = array<i32: 0>} : vector<64x8xi32>
    %9 = vector.broadcast %7 : vector<1x8xi32> to vector<64x8xi32>
    %10 = arith.cmpi eq, %8, %9 : vector<64x8xi32>
    %11 = arith.extui %10 : vector<64x8xi1> to vector<64x8xi32>
    %12 = arith.sitofp %11 : vector<64x8xi32> to vector<64x8xf32>
    %c0_0 = arith.constant 0 : index
    %c0_1 = arith.constant 0 : index
    %13 = vector.load %arg3[%c0_0, %c0_1] : memref<64x128xf32, #tpu.memory_space<vmem>>, vector<64x128xf32>
    %cst = arith.constant dense<0.000000e+00> : vector<8x128xf32>
    %14 = tpu.matmul %12, %13, %cst {dimension_numbers = #tpu.dot_dimension_numbers<[0], [0], [1], [1], [0, 1, 1, 1], [], []>} : vector<64x8xf32>, vector<64x128xf32>, vector<8x128xf32> -> vector<8x128xf32>
    %c0_2 = arith.constant 0 : index
    %c0_3 = arith.constant 0 : index
    %15 = vector.load %arg4[%c0_2, %c0_3] : memref<8x128xf32, #tpu.memory_space<vmem>>, vector<8x128xf32>
    %16 = arith.addf %14, %15 : vector<8x128xf32>
    %c0_4 = arith.constant 0 : index
    %c0_5 = arith.constant 0 : index
    %c0_6 = arith.constant 0 : index
    %17 = vector.load %arg5[%c0_4, %c0_5, %c0_6] : memref<1x8x128xf32, #tpu.memory_space<vmem>>, vector<1x8x128xf32>
    %18 = vector.shape_cast %17 : vector<1x8x128xf32> to vector<8x128xf32>
    %19 = vector.shape_cast %16 : vector<8x128xf32> to vector<1x8x128xf32>
    tpu.vector_store %arg5[%c0_4, %c0_5, %c0_6], %19 {strides = array<i32>} : memref<1x8x128xf32, #tpu.memory_space<vmem>>, vector<1x8x128xf32>,
    return
  }
  func.func @transform_0(%arg0: i32, %arg1: i32) -> (i32, i32, i32) {
    %c0_i32 = arith.constant 0 : i32
    %c0_i32_0 = arith.constant 0 : i32
    %c0_i32_1 = arith.constant 0 : i32
    %c0_i32_2 = arith.constant 0 : i32
    return %c0_i32, %c0_i32_0, %c0_i32_1 : i32, i32, i32
  }
  func.func @transform_1(%arg0: i32, %arg1: i32) -> (i32, i32) {
    %c0_i32 = arith.constant 0 : i32
    %c0_i32_0 = arith.constant 0 : i32
    %c0_i32_1 = arith.constant 0 : i32
    return %c0_i32, %c0_i32_0 : i32, i32
  }
  func.func @transform_2(%arg0: i32, %arg1: i32) -> (i32, i32) {
    %c0_i32 = arith.constant 0 : i32
    %c0_i32_0 = arith.constant 0 : i32
    return %arg0, %c0_i32 : i32, i32
  }
  func.func @transform_3(%arg0: i32, %arg1: i32) -> (i32, i32, i32) {
    %c0_i32 = arith.constant 0 : i32
    %c0_i32_0 = arith.constant 0 : i32
    return %arg1, %arg0, %c0_i32 : i32, i32, i32
  }
}

</mosaic_0001>

<llo_original>
// kernel: tpu_custom_call.1
$region0: #{tpu_custom_call.1}
  #allocation0 [shape = 'u32[]', space=smem, size = 0x4, offset = 0x4, fixed_abs, tag = 'smem constant byte address 0x4 - core index']
  #allocation1 [shape = 'u32[144,128]{1,0:T(1,128)}', space=vmem, size = 0x12000, scoped, tag = 'internal scratch']
  %s0 = inlined_call_operand.hbm [shape: s32[2,1,8], index: 0, kind: input, shape index: {}]
  %s1 = inlined_call_operand.hbm [shape: f32[64,128], index: 1, kind: input, shape index: {}]
  %s2 = inlined_call_operand.hbm [shape: f32[8,128], index: 2, kind: input, shape index: {}]
  %s3 = inlined_call_operand.hbm [shape: f32[2,8,128], index: 3, kind: output, shape index: {}]
  %s4 = sld [smem:[#allocation0]]
  $region57: #{tpu_custom_call.1} parent=0
    _
  %s6 = ssub.s32 1, %s4
  %s7 = scalar_select 0, %s6, %s4
  $region1: #{tpu_custom_call.1} parent=0
    #allocation2 [shape = 'u8[1024]{0}', space=vmem, size = 0x400, scoped, tag = 'input window, operand 0, single buffered']
    #allocation3 [shape = 's32[2]{0}', space=sflag, size = 0x8, scoped, tag = 'scoped memory for tpu_custom_call.1']
    #allocation4 [shape = 's32[2]{0}', space=sflag, size = 0x8, scoped, tag = 'scoped memory for tpu_custom_call.1']
    #allocation5 [shape = 'u8[32768]{0}', space=vmem, size = 0x8000, scoped, tag = 'input window, operand 1, single buffered']
    #allocation6 [shape = 's32[1]{0}', space=sflag, size = 0x4, scoped, tag = 'scoped memory for tpu_custom_call.1']
    #allocation7 [shape = 'u8[4096]{0}', space=vmem, size = 0x1000, scoped, tag = 'input window, operand 2, single buffered']
    #allocation8 [shape = 'u8[8192]{0}', space=vmem, size = 0x2000, scoped, tag = 'output window, operand 0']
    %8 = vsyncpa [#allocation3], 0
    %9 = vsyncpa [#allocation6], 0
    %10 = vsyncpa [#allocation4], 0
    %s11 = scalar_lea.sflag [#allocation4], 1
    %12 = vsyncpa %s11, 0
    loop: start=0, step=1, limit=4
    $region2: #{tpu_custom_call.1} parent=1 // loop_pre_header
      _
    $region3: #{tpu_custom_call.1} parent=1 // loop_header
      %s14 = sphi 0, %s18
      %p15 = scmp.ge.s32.totalorder %s14, 4
      %s21 = sphi 0, %s33
      %s22 = sphi 0, %s29
      %s23 = sphi 0, %s21
      %s24 = sphi 0, %s22
      %s25 = sphi 0, %s23
      %s26 = sphi 0, %s24
      %s34 = sphi 0, %s34
      %s36 = sphi 0, %s34
      %s37 = sphi 0, %s36
      %s51 = sphi 0, %s37
      %s55 = sphi 0, %s55
      %s57 = sphi 0, %s55
      %s58 = sphi 0, %s57
      %s72 = sphi 0, %s58
      %s78 = sphi 0, %s80
      %s81 = sphi 0, %s78
      %s82 = sphi 0, %s81
      %s98 = sphi 0, %s82
      %s106 = sphi 0, %s108
      %s109 = sphi 0, %s106
      %s110 = sphi 0, %s109
      %s126 = sphi 0, %s110
    $region4: #{tpu_custom_call.1} parent=1 // loop_header_branch
      %17 = sbr.rel (%p15) target = $region8
    $region5: #{tpu_custom_call.1} parent=1 // loop_body
      %s19 = ssub.s32 %s14, 1
      %s20 = ssub.s32 %s14, 2
      %s27 = sadd.s32 1, %s22
      %p28 = scmp.ge.s32.totalorder %s27, 2
      %s29 = scalar_select %p28, 0, %s27
      %s30 = sadd.s32 1, %s21
      %s31 = scalar_select %p28, %s30, %s21
      %p32 = scmp.ge.s32.totalorder %s31, 1
      %s33 = scalar_select %p32, 0, %s31
      %s35 = sadd.s32 %s34, 1
      %p38 = scmp.eq.s32.totalorder %s14, 1
      %p39 = scmp.ne.s32.totalorder %s34, %s36
      %p40 = scmp.eq.s32.totalorder %s14, 0
      %p41 = por %p39, %p40
      %p42 = scmp.ne.s32.totalorder %s34, %s36
      %p43 = scmp.eq.s32.totalorder %s19, 1
      %p44 = por %p42, %p43
      %p45 = scmp.ne.s32.totalorder %s36, %s37
      %p46 = scmp.eq.s32.totalorder %s19, 0
      %p47 = por %p45, %p46
      %p48 = scmp.ne.s32.totalorder %s36, %s37
      %p49 = scmp.eq.s32.totalorder %s20, 1
      %p50 = por %p48, %p49
      %p52 = scmp.ne.s32.totalorder %s37, %s51
      %p53 = scmp.eq.s32.totalorder %s20, 0
      %p54 = por %p52, %p53
      %s56 = sadd.s32 %s55, 1
      %p59 = scmp.eq.s32.totalorder %s14, 1
      %p60 = scmp.ne.s32.totalorder %s55, %s57
      %p61 = scmp.eq.s32.totalorder %s14, 0
      %p62 = por %p60, %p61
      %p63 = scmp.ne.s32.totalorder %s55, %s57
      %p64 = scmp.eq.s32.totalorder %s19, 1
      %p65 = por %p63, %p64
      %p66 = scmp.ne.s32.totalorder %s57, %s58
      %p67 = scmp.eq.s32.totalorder %s19, 0
      %p68 = por %p66, %p67
      %p69 = scmp.ne.s32.totalorder %s57, %s58
      %p70 = scmp.eq.s32.totalorder %s20, 1
      %p71 = por %p69, %p70
      %p73 = scmp.ne.s32.totalorder %s58, %s72
      %p74 = scmp.eq.s32.totalorder %s20, 0
      %p75 = por %p73, %p74
      %s76 = ssub.s32 %s21, %s33
      %p77 = scmp.eq.s32.totalorder %s76, 0
      %s79 = sadd.s32 %s78, 1
      %s80 = scalar_select %p77, %s78, %s79
      %p83 = pneg %p77
      %p84 = scmp.eq.s32.totalorder %s14, 1
      %p85 = por %p83, %p84
      %p86 = scmp.ne.s32.totalorder %s78, %s81
      %p87 = scmp.eq.s32.totalorder %s14, 0
      %p88 = por %p86, %p87
      %p89 = scmp.ne.s32.totalorder %s78, %s81
      %p90 = scmp.eq.s32.totalorder %s19, 1
      %p91 = por %p89, %p90
      %p92 = scmp.ne.s32.totalorder %s81, %s82
      %p93 = scmp.eq.s32.totalorder %s19, 0
      %p94 = por %p92, %p93
      %p95 = scmp.ne.s32.totalorder %s81, %s82
      %p96 = scmp.eq.s32.totalorder %s20, 1
      %p97 = por %p95, %p96
      %p99 = scmp.ne.s32.totalorder %s82, %s98
      %p100 = scmp.eq.s32.totalorder %s20, 0
      %p101 = por %p99, %p100
      %s102 = ssub.s32 %s22, %s29
      %s103 = ssub.s32 %s21, %s33
      %s104 = sor.u32 %s102, %s103
      %p105 = scmp.eq.s32.totalorder %s104, 0
      %s107 = sadd.s32 %s106, 1
      %s108 = scalar_select %p105, %s106, %s107
      %p111 = pneg %p105
      %p112 = scmp.eq.s32.totalorder %s14, 1
      %p113 = por %p111, %p112
      %p114 = scmp.ne.s32.totalorder %s106, %s109
      %p115 = scmp.eq.s32.totalorder %s14, 0
      %p116 = por %p114, %p115
      %p117 = scmp.ne.s32.totalorder %s106, %s109
      %p118 = scmp.eq.s32.totalorder %s19, 1
      %p119 = por %p117, %p118
      %p120 = scmp.ne.s32.totalorder %s109, %s110
      %p121 = scmp.eq.s32.totalorder %s19, 0
      %p122 = por %p120, %p121
      %p123 = scmp.ne.s32.totalorder %s109, %s110
      %p124 = scmp.eq.s32.totalorder %s20, 1
      %p125 = por %p123, %p124
      %p127 = scmp.ne.s32.totalorder %s110, %s126
      %p128 = scmp.eq.s32.totalorder %s20, 0
      %p129 = por %p127, %p128
      %p130 = scmp.le.s32.totalorder 1, %s14
      %p131 = scmp.lt.s32.totalorder %s14, 3
      %p132 = pnand %p130, %p131
      %p133 = pneg %p132
      // Predicated region
      $region9: #{tpu_custom_call.1} parent=5 // pred_check
        _
      $region10: #{tpu_custom_call.1} parent=5 // pred_check_branch
        %135 = sbr.rel (%p132) target = $region12
      $region11: #{tpu_custom_call.1} parent=5 // pred_region
        %s136 = ssub.s32 %s14, 1
        // Predicated region
        $region13: #{tpu_custom_call.1} parent=11 // pred_check
          %p137 = pneg %p47
        $region14: #{tpu_custom_call.1} parent=11 // pred_check_branch
          %139 = sbr.rel (%p137) target = $region16
        $region15: #{tpu_custom_call.1} parent=11 // pred_region
          %s141 = ssub.s32 32, 32
          %142 = vsyncadd [#allocation3], %s141
          %s143 = sshll.u32 [#allocation2], 4
          %s144 = int_to_ptr.vmem [resolvable:$true] %s143
          %149 = dma.hbm_to_vmem [thread:$0]  %s0, 32, %s144, [#allocation3], 16, 16, 1
        $region16: #{tpu_custom_call.1} parent=11 // pred_fallthru
          _
        // Predicated region
        $region17: #{tpu_custom_call.1} parent=11 // pred_check
          %p150 = pneg %p68
        $region18: #{tpu_custom_call.1} parent=11 // pred_check_branch
          %152 = sbr.rel (%p150) target = $region20
        $region19: #{tpu_custom_call.1} parent=11 // pred_region
          %s154 = ssub.s32 1024, 1024
          %155 = vsyncadd [#allocation6], %s154
          %s156 = sshll.u32 [#allocation5], 4
          %s157 = int_to_ptr.vmem [resolvable:$true] %s156
          %162 = dma.hbm_to_vmem [thread:$0]  %s1, 1024, %s157, [#allocation6], 128, 128, 8
        $region20: #{tpu_custom_call.1} parent=11 // pred_fallthru
          _
        // Predicated region
        $region21: #{tpu_custom_call.1} parent=11 // pred_check
          %p163 = pneg %p94
        $region22: #{tpu_custom_call.1} parent=11 // pred_check_branch
          %165 = sbr.rel (%p163) target = $region24
        $region23: #{tpu_custom_call.1} parent=11 // pred_region
          %s167 = ssub.s32 128, 128
          %168 = vsyncadd [#allocation6], %s167
          %s169 = smul.addr %s23, 128
          %s170 = scalar_lea.hbm %s2, %s169
          %s172 = sshll.u32 [#allocation7], 4
          %s173 = int_to_ptr.vmem [resolvable:$true] %s172
          %175 = dma.hbm_to_vmem [thread:$0]  %s170, 128, %s173, [#allocation6]
        $region24: #{tpu_custom_call.1} parent=11 // pred_fallthru
          _
      $region12: #{tpu_custom_call.1} parent=5 // pred_fallthru
        _
      %p176 = scmp.lt.s32.totalorder %s14, 2
      // Predicated region
      $region25: #{tpu_custom_call.1} parent=5 // pred_check
        %p177 = pneg %p176
      $region26: #{tpu_custom_call.1} parent=5 // pred_check_branch
        %179 = sbr.rel (%p177) target = $region28
      $region27: #{tpu_custom_call.1} parent=5 // pred_region
        _
      $region28: #{tpu_custom_call.1} parent=5 // pred_fallthru
        _
      %p180 = scmp.le.s32.totalorder 1, %s14
      %p181 = scmp.lt.s32.totalorder %s14, 3
      %p182 = pnand %p180, %p181
      %p183 = pneg %p182
      // Predicated region
      $region29: #{tpu_custom_call.1} parent=5 // pred_check
        _
      $region30: #{tpu_custom_call.1} parent=5 // pred_check_branch
        %185 = sbr.rel (%p182) target = $region32
      $region31: #{tpu_custom_call.1} parent=5 // pred_region
        %s186 = ssub.s32 %s14, 1
        // Predicated region
        $region33: #{tpu_custom_call.1} parent=31 // pred_check
          %p187 = pneg %p47
        $region34: #{tpu_custom_call.1} parent=31 // pred_check_branch
          %189 = sbr.rel (%p187) target = $region36
        $region35: #{tpu_custom_call.1} parent=31 // pred_region
          %190 = dma.done [#allocation3], 32
        $region36: #{tpu_custom_call.1} parent=31 // pred_fallthru
          _
        // Predicated region
        $region37: #{tpu_custom_call.1} parent=31 // pred_check
          %p191 = pneg %p68
        $region38: #{tpu_custom_call.1} parent=31 // pred_check_branch
          %193 = sbr.rel (%p191) target = $region40
        $region39: #{tpu_custom_call.1} parent=31 // pred_region
          %194 = dma.done [#allocation6], 1024
        $region40: #{tpu_custom_call.1} parent=31 // pred_fallthru
          _
        // Predicated region
        $region41: #{tpu_custom_call.1} parent=31 // pred_check
          %p195 = pneg %p94
        $region42: #{tpu_custom_call.1} parent=31 // pred_check_branch
          %197 = sbr.rel (%p195) target = $region44
        $region43: #{tpu_custom_call.1} parent=31 // pred_region
          %198 = dma.done [#allocation6], 128
        $region44: #{tpu_custom_call.1} parent=31 // pred_fallthru
          _
        %p199 = pneg %p47
        %p200 = pneg %p44
        %p201 = pneg %p68
        %p202 = pneg %p65
        %p203 = pneg %p94
        %p204 = pneg %p91
        %p205 = pneg %p122
        %p206 = pneg %p119
        %s207 = sand.u32 %s109, 1
        %s208 = scalar_lea.sflag [#allocation4], %s207
        %s209 = sand.u32 %s109, 1
        %s210 = smul.addr %s209, 8
        %s211 = scalar_lea.vmem [#allocation8], %s210
        %s212 = sadd.s32 %s23, %s24
        %s213 = scalar_lea.vmem [#allocation2], %s212
        %v214 = vld [vmem:[%s213] sm:$0x1]
        %vm215 = vcmp.gt.s32.totalorder %v214, 0
        %v216 = vsel %vm215, %v214, 0
        %vm217 = vcmp.lt.s32.totalorder %v216, 63
        %v218 = vsel %vm217, %v216, 63
        %v219 = vlaneseq
        %v220 = vshrl.u32 %v219, 7
        %v221 = vadd.s32 %v220, 8
        %v222 = vadd.s32 %v220, 16
        %v223 = vadd.s32 %v220, 24
        %v224 = vadd.s32 %v220, 32
        %v225 = vadd.s32 %v220, 40
        %v226 = vadd.s32 %v220, 48
        %v227 = vadd.s32 %v220, 56
        %v228 = vlaneseq
        %v229 = vshrl.u32 %v228, 7
        %v230 = vsub.s32 0, %v229
        %v231 = vrot.slane %v218, %v230
        %vm232 = vcmp.eq.s32.totalorder %v220, %v231
        %vm233 = vcmp.eq.s32.totalorder %v221, %v231
        %vm234 = vcmp.eq.s32.totalorder %v222, %v231
        %vm235 = vcmp.eq.s32.totalorder %v223, %v231
        %vm236 = vcmp.eq.s32.totalorder %v224, %v231
        %vm237 = vcmp.eq.s32.totalorder %v225, %v231
        %vm238 = vcmp.eq.s32.totalorder %v226, %v231
        %vm239 = vcmp.eq.s32.totalorder %v227, %v231
        %v240 = vsel %vm232, 1, 0
        %v241 = vsel %vm233, 1, 0
        %v242 = vsel %vm234, 1, 0
        %v243 = vsel %vm235, 1, 0
        %v244 = vsel %vm236, 1, 0
        %v245 = vsel %vm237, 1, 0
        %v246 = vsel %vm238, 1, 0
        %v247 = vsel %vm239, 1, 0
        %v248 = vcvt.s32.f32 %v240
        %v249 = vcvt.s32.f32 %v241
        %v250 = vcvt.s32.f32 %v242
        %v251 = vcvt.s32.f32 %v243
        %v252 = vcvt.s32.f32 %v244
        %v253 = vcvt.s32.f32 %v245
        %v254 = vcvt.s32.f32 %v246
        %v255 = vcvt.s32.f32 %v247
        %v256 = vld [vmem:[#allocation5] sm:$0xff]
        %v257 = vld [vmem:[#allocation5 + $0x8] sm:$0xff]
        %v258 = vld [vmem:[#allocation5 + $0x10] sm:$0xff]
        %v259 = vld [vmem:[#allocation5 + $0x18] sm:$0xff]
        %v260 = vld [vmem:[#allocation5 + $0x20] sm:$0xff]
        %v261 = vld [vmem:[#allocation5 + $0x28] sm:$0xff]
        %v262 = vld [vmem:[#allocation5 + $0x30] sm:$0xff]
        %v263 = vld [vmem:[#allocation5 + $0x38] sm:$0xff]
        %v264 = vld [vmem:[#allocation7] sm:$0xff]
        %265 = vxpose.xlu0.b32.start [1/16] %v248, 128
        %266 = vxpose.xlu0.b32.cont [2/16] %v249, 128
        %267 = vxpose.xlu0.b32.cont [3/16] %v250, 128
        %268 = vxpose.xlu0.b32.cont [4/16] %v251, 128
        %269 = vxpose.xlu0.b32.cont [5/16] %v252, 128
        %270 = vxpose.xlu0.b32.cont [6/16] %v253, 128
        %271 = vxpose.xlu0.b32.cont [7/16] %v254, 128
        %272 = vxpose.xlu0.b32.cont [8/16] %v255, 128
        %273 = vxpose.xlu0.b32.cont [9/16] 0.0, 128
        %274 = vxpose.xlu0.b32.cont [10/16] 0.0, 128
        %275 = vxpose.xlu0.b32.cont [11/16] 0.0, 128
        %276 = vxpose.xlu0.b32.cont [12/16] 0.0, 128
        %277 = vxpose.xlu0.b32.cont [13/16] 0.0, 128
        %278 = vxpose.xlu0.b32.cont [14/16] 0.0, 128
        %279 = vxpose.xlu0.b32.cont [15/16] 0.0, 128
        %280 = vxpose.xlu0.b32.end [16/16] 0.0, 128
        %v281 = vpop.trf.xlu0
        %v282 = vpop.trf.xlu0
        %v283 = vpop.trf.xlu0
        %v284 = vpop.trf.xlu0
        %v285 = vpop.trf.xlu0
        %v286 = vpop.trf.xlu0
        %v287 = vpop.trf.xlu0
        %v288 = vpop.trf.xlu0
        %v289 = vpop.trf.xlu0
        %v290 = vpop.trf.xlu0
        %v291 = vpop.trf.xlu0
        %v292 = vpop.trf.xlu0
        %v293 = vpop.trf.xlu0
        %v294 = vpop.trf.xlu0
        %v295 = vpop.trf.xlu0
        %v296 = vpop.trf.xlu0
        %vm297 = vcmask 523264
        %v299 = vsel %vm297, %v281, 0
        %301 = vmatprep.subr.mxu0 0.0
        %302 = vmatpush1.msra.mxu0 %v256
        %303 = vmatprep.subr.mxu0 0.0
        %304 = vmatpush1.msra.mxu0 %v257
        %305 = vmatprep.subr.mxu0 0.0
        %306 = vmatpush1.msra.mxu0 %v258
        %307 = vmatprep.subr.mxu0 0.0
        %308 = vmatpush1.msra.mxu0 %v259
        %309 = vmatprep.subr.mxu0 0.0
        %310 = vmatpush1.msra.mxu0 %v260
        %311 = vmatprep.subr.mxu0 0.0
        %312 = vmatpush1.msra.mxu0 %v261
        %313 = vmatprep.subr.mxu0 0.0
        %314 = vmatpush1.msra.mxu0 %v262
        %315 = vmatprep.subr.mxu0 0.0
        %316 = vmatpush1.msra.mxu0 %v263
        %317 = vmatprep.subr.mxu0 0.0
        %318 = vmatpush1.msra.mxu0 0.0
        %319 = vmatprep.subr.mxu0 0.0
        %320 = vmatpush1.msra.mxu0 0.0
        %321 = vmatprep.subr.mxu0 0.0
        %322 = vmatpush1.msra.mxu0 0.0
        %323 = vmatprep.subr.mxu0 0.0
        %324 = vmatpush1.msra.mxu0 0.0
        %325 = vmatprep.subr.mxu0 0.0
        %326 = vmatpush1.msra.mxu0 0.0
        %327 = vmatprep.subr.mxu0 0.0
        %328 = vmatpush1.msra.mxu0 0.0
        %329 = vmatprep.subr.mxu0 0.0
        %330 = vmatpush1.msra.mxu0 0.0
        %331 = vmatprep.subr.mxu0 0.0
        %332 = vmatpush1.msra.mxu0 0.0
        %333 = vmatprep.subr.mxu0 0.0
        %334 = vmatpush1.msra.mxu0 0.0
        %335 = vmatprep.subr.mxu0 0.0
        %336 = vmatpush1.msra.mxu0 0.0
        %337 = vmatprep.subr.mxu0 0.0
        %338 = vmatpush1.msra.mxu0 0.0
        %339 = vmatprep.subr.mxu0 0.0
        %340 = vmatpush1.msra.mxu0 0.0
        %341 = vmatprep.subr.mxu0 0.0
        %342 = vmatpush1.msra.mxu0 0.0
        %343 = vmatprep.subr.mxu0 0.0
        %344 = vmatpush1.msra.mxu0 0.0
        %345 = vmatprep.subr.mxu0 0.0
        %346 = vmatpush1.msra.mxu0 0.0
        %347 = vmatprep.subr.mxu0 0.0
        %348 = vmatpush1.msra.mxu0 0.0
        %349 = vmatprep.subr.mxu0 0.0
        %350 = vmatpush1.msra.mxu0 0.0
        %351 = vmatprep.subr.mxu0 0.0
        %352 = vmatpush1.msra.mxu0 0.0
        %353 = vmatprep.subr.mxu0 0.0
        %354 = vmatpush1.msra.mxu0 0.0
        %355 = vmatprep.subr.mxu0 0.0
        %356 = vmatpush1.msra.mxu0 0.0
        %357 = vmatprep.subr.mxu0 0.0
        %358 = vmatpush1.msra.mxu0 0.0
        %359 = vmatprep.subr.mxu0 0.0
        %360 = vmatpush1.msra.mxu0 0.0
        %361 = vmatprep.subr.mxu0 0.0
        %362 = vmatpush1.msra.mxu0 0.0
        %363 = vmatprep.subr.mxu0 0.0
        %364 = vmatpush1.msra.mxu0 0.0
        %365 = vmatprep.mubr.f32.mxu0 0.0
        %366 = vmatmul.mubr.f32.gmra.mrb[0].mxu0 %v299
        %v367 = vpop.f32.mrb[0].mxu0
        %v368 = vadd.f32 %v264, %v367
        %v369 = vpop.f32.mrb[0].mxu0
        %370 = vdwg.mxu0
        %371 = vst [vmem:[%s211] sm:$0xff] %v368
        %s372 = sand.u32 %s109, 1
        %s373 = scalar_lea.sflag [#allocation4], %s372
        %s374 = sand.u32 %s109, 1
        %s375 = smul.addr %s374, 8
        %s376 = scalar_lea.vmem [#allocation8], %s375
        // Predicated region
        $region45: #{tpu_custom_call.1} parent=31 // pred_check
          %p377 = pneg %p119
        $region46: #{tpu_custom_call.1} parent=31 // pred_check_branch
          %379 = sbr.rel (%p377) target = $region48
        $region47: #{tpu_custom_call.1} parent=31 // pred_region
          %s381 = ssub.s32 128, 128
          %382 = vsyncadd %s373, %s381
          %s383 = sadd.s32 %s23, %s24
          %s384 = smul.addr %s383, 128
          %s385 = scalar_lea.hbm %s3, %s384
          %s387 = sshll.u32 %s376, 4
          %s388 = int_to_ptr.vmem [resolvable:$true] %s387
          %390 = dma.vmem_to_hbm [thread:$0]  %s388, 128, %s385, %s373
        $region48: #{tpu_custom_call.1} parent=31 // pred_fallthru
          _
      $region32: #{tpu_custom_call.1} parent=5 // pred_fallthru
        _
      %p391 = scmp.le.s32.totalorder 2, %s14
      // Predicated region
      $region49: #{tpu_custom_call.1} parent=5 // pred_check
        %p392 = pneg %p391
      $region50: #{tpu_custom_call.1} parent=5 // pred_check_branch
        %394 = sbr.rel (%p392) target = $region52
      $region51: #{tpu_custom_call.1} parent=5 // pred_region
        %s395 = ssub.s32 %s14, 2
        // Predicated region
        $region53: #{tpu_custom_call.1} parent=51 // pred_check
          %p396 = pneg %p125
        $region54: #{tpu_custom_call.1} parent=51 // pred_check_branch
          %398 = sbr.rel (%p396) target = $region56
        $region55: #{tpu_custom_call.1} parent=51 // pred_region
          %s399 = sand.u32 %s110, 1
          %s400 = scalar_lea.sflag [#allocation4], %s399
          %s401 = sand.u32 %s110, 1
          %s402 = smul.addr %s401, 8
          %s403 = scalar_lea.vmem [#allocation8], %s402
          %404 = dma.done %s400, 128
        $region56: #{tpu_custom_call.1} parent=51 // pred_fallthru
          _
      $region52: #{tpu_custom_call.1} parent=5 // pred_fallthru
        _
    $region6: #{tpu_custom_call.1} parent=1 // loop_footer
      %s18 = sadd.s32 1, %s14
    $region7: #{tpu_custom_call.1} parent=1 // loop_footer_branch
      %13 = sbr.rel target = $region3
    $region8: #{tpu_custom_call.1} parent=1 // loop_exit
      _
    %405 = vsyncpa [#allocation3], 1
    %s406 = scalar_lea.sflag [#allocation3], 1
    %407 = vsyncpa %s406, 1
    %408 = vsyncpa [#allocation6], 1
    %409 = vsyncpa [#allocation4], 1
    %s410 = scalar_lea.sflag [#allocation4], 1
    %411 = vsyncpa %s410, 1

</llo_original>
